<compile_context>
chip_gen: v5e
topology: v5e:2x2
jax: 0.10.0
libtpu: 0.0.40
codegen_flags: <defaults>
</compile_context>

<pallas_src>
import jax
import jax.numpy as jnp
from jax.experimental import pallas as pl
from jax.experimental.pallas import tpu as pltpu


# --------------------------------------------------------------------------- #
# Kernel body
# --------------------------------------------------------------------------- #
def _make_kernel(bag_tile, n_bags_total, compute_dtype, no_norm, needs_mask):
    """Builds the per-grid-step kernel body (all arguments are static)."""

    def kernel(x_ref, w1_ref, w2t_ref, out_ref, a_ref):
        x = x_ref[...]                                        # (Bb, N, L)
        bb, n, l = x.shape
        rows = bb * n

        # ---- attention MLP ------------------------------------------------
        # Flatten bags so the x @ w1 matmul fills the MXU M dimension.  For
        # N % 8 == 0 this reshape is a pure relabel of the sublane tiling.
        xf = x.reshape(rows, l).astype(compute_dtype)
        w1 = w1_ref[...].astype(compute_dtype)
        h = jnp.dot(xf, w1, preferred_element_type=jnp.float32)   # (rows, D) f32
        h = jnp.maximum(h, 0.0)                                    # ReLU

        # Second projection (K == 1): VPU multiply + lane reduction against the
        # broadcast (1, D) w2 row instead of a second 1-column MXU matmul.
        w2_row = w2t_ref[...].astype(jnp.float32)                  # (1, D)
        s = jnp.sum(h * w2_row, axis=-1, keepdims=True)            # (rows, 1) f32

        if needs_mask:
            # Ragged last bag tile: zero only the logits of out-of-range bags so
            # their (independent) softmax stays finite.  Their pooled rows may
            # hold garbage, but they land in the padded output region which
            # Pallas discards on writeback.  Do NOT change the out_specs
            # without revisiting this assumption.
            n_valid_rows = (n_bags_total - pl.program_id(0) * bag_tile) * n
            row_ids = jax.lax.broadcasted_iota(jnp.int32, (rows, 1), 0)
            s = jnp.where(row_ids < n_valid_rows, s, 0.0)

        # ---- softmax over the N instances (sublane reductions, no relayout) --
        s_bn1 = s.reshape(bb, n, 1)                                # free relabel
        m = jnp.max(s_bn1, axis=1, keepdims=True)                  # (Bb, 1, 1)
        p = jnp.exp(s_bn1 - m)
        denom = jnp.sum(p, axis=1, keepdims=True)                  # (Bb, 1, 1)
        a = p / denom                                              # (Bb, N, 1)

        # Only the requested attention tensor is written back, in its natural
        # (Bb, N, K) column layout; the wrapper transposes the tiny result.
        a_ref[...] = (s_bn1 if no_norm else a).astype(a_ref.dtype)

        # ---- attention-weighted pooling on the VPU --------------------------
        # (Bb,N,1) * (Bb,N,L): broadcast over L lanes, reduce over N sublanes.
        weighted = a * x.astype(jnp.float32)                       # (Bb, N, L)
        out_ref[...] = jnp.sum(weighted, axis=1).astype(out_ref.dtype)  # (Bb, L)

    return kernel


# --------------------------------------------------------------------------- #
# Tiling / VMEM heuristics
# --------------------------------------------------------------------------- #
def _vmem_capacity_bytes():
    """Physical VMEM of the local TPU; conservative 64 MiB (v7x) fallback."""
    fallback = 64 * 2**20
    try:
        info = pltpu.get_tpu_info()
    except Exception:
        return fallback
    for name in ("vmem_capacity_bytes", "vmem_size_bytes", "vmem_bytes"):
        v = getattr(info, name, None)
        if v:
            return int(v)
    return fallback


def _per_bag_vmem_bytes(N, L, D, x_itemsize, compute_itemsize, out_itemsize):
    """Conservative VMEM footprint per bag (inputs, temps, outputs)."""
    f32 = 4
    vreg = 8 * 128 * f32                      # one lane-padded (8,128) f32 tile
    bag_tiles = -(-N // 8)                    # sublane tiles per bag
    return (2 * N * L * x_itemsize            # double-buffered x input block
            + N * L * compute_itemsize        # cast copy of the tile (bf16 path)
            + 2 * N * D * f32                 # h + one fused product temp
            + N * L * f32                     # a * x weighted temp
            + 4 * bag_tiles * vreg            # lane-padded score/softmax columns
            + 2 * bag_tiles * vreg            # double-buffered (N, K) A block
            + 2 * L * out_itemsize)           # double-buffered pooled output row


# --------------------------------------------------------------------------- #
# Wrapper
# --------------------------------------------------------------------------- #
def attention_forward(x, w1, w2, no_norm=False, *, compute_dtype=None,
                      bag_tile=None):
    """MIL gated-attention pooling.

    x: (B, N, L) bags of N instances.  w1: (L, D).  w2: (D, K=1).
    Returns (out (B, K, L), A (B, K, N)); A is the softmax attention or the
    pre-softmax logits when no_norm=True, matching the PyTorch module.
    """
    B, N, L = x.shape
    L2, D = w1.shape
    D2, K = w2.shape
    assert L == L2 and D == D2
    assert K == 1, "kernel specialised to the module's hardcoded K=1"

    compute_dtype = x.dtype if compute_dtype is None else jnp.dtype(compute_dtype)
    out_dtype = x.dtype
    a_dtype = x.dtype        # matches torch: A carries the input dtype

    # ---- generation-aware VMEM budget & bag tiling --------------------------
    vmem_cap = (3 * _vmem_capacity_bytes()) // 4      # ~48 MiB v7x, ~96 MiB v5e/v6e
    weights_bytes = 2 * (L * D * w1.dtype.itemsize + K * D * w2.dtype.itemsize)
    per_bag = _per_bag_vmem_bytes(N, L, D, x.dtype.itemsize,
                                  jnp.dtype(compute_dtype).itemsize,
                                  jnp.dtype(out_dtype).itemsize)
    if bag_tile is None:
        budget = max(8 * 2**20, (6 * vmem_cap) // 10 - weights_bytes)
        target_rows = 4096                             # amortise ~0.35us/step overhead
        bag_tile = min(max(1, -(-target_rows // max(N, 1))),
                       max(1, budget // max(per_bag, 1)), B)
        # Keep >= 2 grid steps for non-tiny batches: shards the "parallel" bag
        # axis across v7x's two TensorCores and lets the x DMA pipeline.
        if bag_tile >= B and B >= 16:
            bag_tile = -(-B // 2)
    bag_tile = max(1, min(int(bag_tile), B))
    # (8, 128) rule: the pooled-output block is (bag_tile, L), so bag_tile must
    # be a multiple of 8 unless it spans the whole batch.
    if bag_tile < B:
        bag_tile = min(((bag_tile + 7) // 8) * 8, B)
    grid_b = pl.cdiv(B, bag_tile)
    needs_mask = (B % bag_tile) != 0

    needed = bag_tile * per_bag + weights_bytes + (4 << 20)
    vmem_limit = int(min(vmem_cap, max(16 << 20, (needed * 5) // 4)))

    kernel = _make_kernel(bag_tile, B, compute_dtype, no_norm, needs_mask)

    out2d, a_nk = pl.pallas_call(
        kernel,
        out_shape=(
            jax.ShapeDtypeStruct((B, L), out_dtype),    # pooled features (K squeezed)
            jax.ShapeDtypeStruct((B, N, K), a_dtype),   # attention, natural layout
        ),
        grid_spec=pltpu.PrefetchScalarGridSpec(
            num_scalar_prefetch=0,
            grid=(grid_b,),
            in_specs=[
                pl.BlockSpec((bag_tile, N, L), lambda b: (b, 0, 0)),
                pl.BlockSpec((L, D), lambda b: (0, 0)),
                pl.BlockSpec((K, D), lambda b: (0, 0)),
            ],
            out_specs=[
                pl.BlockSpec((bag_tile, L), lambda b: (b, 0)),
                pl.BlockSpec((bag_tile, N, K), lambda b: (b, 0, 0)),
            ],
        ),
        compiler_params=pltpu.CompilerParams(
            dimension_semantics=("parallel",),
            vmem_limit_bytes=vmem_limit),
    )(x, w1, jnp.transpose(w2))                        # w2 passed lane-major (K, D)

    out = out2d.reshape(B, K, L)                       # free reshape (K == 1)
    a = jnp.swapaxes(a_nk, -1, -2)                     # tiny (B, K, N) transpose
    return out, a


# --------------------------------------------------------------------------- #
# Pure-JAX reference + tests
# --------------------------------------------------------------------------- #
def _reference(x, w1, w2, no_norm=False, compute_dtype=None):
    compute_dtype = x.dtype if compute_dtype is None else compute_dtype
    h = jnp.dot(x.astype(compute_dtype), w1.astype(compute_dtype),
                preferred_element_type=jnp.float32)
    h = jnp.maximum(h, 0.0)
    s = jnp.dot(h, w2.astype(jnp.float32),
                preferred_element_type=jnp.float32)     # (B, N, K)
    a_ori = jnp.swapaxes(s, -1, -2)                     # (B, K, N)
    a = jax.nn.softmax(a_ori, axis=-1)
    out = jnp.matmul(a, x.astype(jnp.float32))          # (B, K, L)
    out = out.astype(x.dtype)
    return (out, a_ori.astype(x.dtype)) if no_norm else (out, a.astype(x.dtype))


if __name__ == "__main__":
    def make_inputs(key, B, N, L, D, K):
        kx, k1, k2 = jax.random.split(key, 3)
        x = jax.random.normal(kx, (B, N, L), dtype=jnp.float32)
        # nn.Linear default init: U(-1/sqrt(fan_in), 1/sqrt(fan_in))
        w1 = jax.random.uniform(k1, (L, D), jnp.float32,
                                minval=-1.0 / (L ** 0.5), maxval=1.0 / (L ** 0.5))
        w2 = jax.random.uniform(k2, (D, K), jnp.float32,
                                minval=-1.0 / (D ** 0.5), maxval=1.0 / (D ** 0.5))
        return x, w1, w2

    # Small shapes consistent with the module (hidden D=256, K=1).
    D, K = 256, 1

    # --- f32 path (exact), single tile ----------------------------------------
    B, N, L = 2, 8, 32
    x, w1, w2 = make_inputs(jax.random.PRNGKey(0), B, N, L, D, K)
    out, a = attention_forward(x, w1, w2, no_norm=False)
    out = jax.block_until_ready(out); a = jax.block_until_ready(a)
    out_ref, a_ref = _reference(x, w1, w2, no_norm=False)
    assert out.shape == (B, K, L) and a.shape == (B, K, N)
    assert jnp.allclose(out, out_ref, atol=1e-5, rtol=1e-5)
    assert jnp.allclose(a, a_ref, atol=1e-5, rtol=1e-5)

    out_nn, a_ori = attention_forward(x, w1, w2, no_norm=True)
    out_nn_ref, a_ori_ref = _reference(x, w1, w2, no_norm=True)
    assert jnp.allclose(jax.block_until_ready(a_ori), a_ori_ref, atol=1e-5, rtol=1e-5)
    assert jnp.allclose(jax.block_until_ready(out_nn), out_nn_ref, atol=1e-5, rtol=1e-5)

    # --- bf16-operand path (x @ w1 on the MXU bf16 path, f32 accumulation) ----
    out_bf, a_bf = attention_forward(x, w1, w2, no_norm=False,
                                     compute_dtype=jnp.bfloat16)
    out_bf = jax.block_until_ready(out_bf); a_bf = jax.block_until_ready(a_bf)
    out_bref, a_bref = _reference(x, w1, w2, no_norm=False,
                                  compute_dtype=jnp.bfloat16)
    assert jnp.allclose(out_bf, out_bref, atol=2e-2, rtol=2e-2)
    assert jnp.allclose(a_bf, a_bref, atol=2e-2, rtol=2e-2)

    # --- explicit bag tiling with a ragged (masked) last tile ------------------
    B2, N2, L2 = 21, 8, 64
    x2, w1b, w2b = make_inputs(jax.random.PRNGKey(1), B2, N2, L2, D, K)
    out2, a2 = attention_forward(x2, w1b, w2b, no_norm=False, bag_tile=8)
    out2 = jax.block_until_ready(out2); a2 = jax.block_until_ready(a2)
    out2_ref, a2_ref = _reference(x2, w1b, w2b, no_norm=False)
    assert out2.shape == (B2, K, L2) and a2.shape == (B2, K, N2)
    assert jnp.allclose(out2, out2_ref, atol=1e-5, rtol=1e-5)
    assert jnp.allclose(a2, a2_ref, atol=1e-5, rtol=1e-5)

    # --- auto-tiled path (grid >= 2, ragged tail handled by the logit mask) ----
    B3, N3, L3 = 37, 8, 32
    x3, w1c, w2c = make_inputs(jax.random.PRNGKey(2), B3, N3, L3, D, K)
    out3, a3 = attention_forward(x3, w1c, w2c, no_norm=False)
    out3 = jax.block_until_ready(out3); a3 = jax.block_until_ready(a3)
    out3_ref, a3_ref = _reference(x3, w1c, w2c, no_norm=False)
    assert jnp.allclose(out3, out3_ref, atol=1e-5, rtol=1e-5)
    assert jnp.allclose(a3, a3_ref, atol=1e-5, rtol=1e-5)

    print("KERNEL_OK")
</pallas_src>

<mosaic_0001>
module attributes {stable_mosaic.version = 11 : i64} {
  func.func @kernel(%arg0: i32, %arg1: memref<2x8x32xf32, #tpu.memory_space<vmem>>, %arg2: memref<32x256xf32, #tpu.memory_space<vmem>>, %arg3: memref<1x256xf32, #tpu.memory_space<vmem>>, %arg4: memref<2x32xf32, #tpu.memory_space<vmem>>, %arg5: memref<2x8x1xf32, #tpu.memory_space<vmem>>) attributes {dimension_semantics = [#tpu.dimension_semantics<parallel>], iteration_bounds = array<i64: 1>, scalar_prefetch = 0 : i64, scratch_operands = 0 : i64, tpu.core_type = #tpu.core_type<tc>, window_params = [{transform_indices = @transform_0, window_bounds = array<i64: 2, 8, 32>}, {pipeline_mode = #tpu.pipeline_mode<synchronous>, transform_indices = @transform_1, window_bounds = array<i64: 32, 256>}, {pipeline_mode = #tpu.pipeline_mode<synchronous>, transform_indices = @transform_2, window_bounds = array<i64: 1, 256>}, {transform_indices = @transform_3, window_bounds = array<i64: 2, 32>}, {transform_indices = @transform_4, window_bounds = array<i64: 2, 8, 1>}]} {
    %c0 = arith.constant 0 : index
    %c0_0 = arith.constant 0 : index
    %c0_1 = arith.constant 0 : index
    %0 = vector.load %arg1[%c0, %c0_0, %c0_1] : memref<2x8x32xf32, #tpu.memory_space<vmem>>, vector<2x8x32xf32>
    %1 = vector.shape_cast %0 : vector<2x8x32xf32> to vector<16x32xf32>
    %c0_2 = arith.constant 0 : index
    %c0_3 = arith.constant 0 : index
    %2 = vector.load %arg2[%c0_2, %c0_3] : memref<32x256xf32, #tpu.memory_space<vmem>>, vector<32x256xf32>
    %cst = arith.constant dense<0.000000e+00> : vector<16x256xf32>
    %3 = tpu.matmul %1, %2, %cst {dimension_numbers = #tpu.dot_dimension_numbers<[1], [0], [0], [1], [0, 0, 1, 1], [], []>} : vector<16x32xf32>, vector<32x256xf32>, vector<16x256xf32> -> vector<16x256xf32>
    %cst_4 = arith.constant 0.000000e+00 : f32
    %4 = vector.broadcast %cst_4 : f32 to vector<16x256xf32>
    %5 = arith.maximumf %3, %4 : vector<16x256xf32>
    %c0_5 = arith.constant 0 : index
    %c0_6 = arith.constant 0 : index
    %6 = vector.load %arg3[%c0_5, %c0_6] : memref<1x256xf32, #tpu.memory_space<vmem>>, vector<1x256xf32>
    %7 = vector.broadcast %6 : vector<1x256xf32> to vector<16x256xf32>
    %8 = arith.mulf %5, %7 : vector<16x256xf32>
    %cst_7 = arith.constant dense<0.000000e+00> : vector<16xf32>
    %9 = vector.multi_reduction <add>, %8, %cst_7 [1] : vector<16x256xf32> to vector<16xf32>
    %10 = vector.shape_cast %9 : vector<16xf32> to vector<16x1xf32>
    %11 = vector.shape_cast %10 : vector<16x1xf32> to vector<2x8x1xf32>
    %cst_8 = arith.constant dense<0xFF800000> : vector<2x1xf32>
    %12 = vector.multi_reduction <maximumf>, %11, %cst_8 [1] : vector<2x8x1xf32> to vector<2x1xf32>
    %13 = vector.shape_cast %12 : vector<2x1xf32> to vector<2x1x1xf32>
    %14 = vector.broadcast %13 : vector<2x1x1xf32> to vector<2x8x1xf32>
    %15 = arith.subf %11, %14 : vector<2x8x1xf32>
    %16 = math.exp %15 : vector<2x8x1xf32>
    %cst_9 = arith.constant dense<0.000000e+00> : vector<2x1xf32>
    %17 = vector.multi_reduction <add>, %16, %cst_9 [1] : vector<2x8x1xf32> to vector<2x1xf32>
    %18 = vector.shape_cast %17 : vector<2x1xf32> to vector<2x1x1xf32>
    %19 = vector.broadcast %18 : vector<2x1x1xf32> to vector<2x8x1xf32>
    %20 = arith.divf %16, %19 : vector<2x8x1xf32>
    %c0_10 = arith.constant 0 : index
    %c0_11 = arith.constant 0 : index
    %c0_12 = arith.constant 0 : index
    %21 = vector.load %arg5[%c0_10, %c0_11, %c0_12] : memref<2x8x1xf32, #tpu.memory_space<vmem>>, vector<2x8x1xf32>
    tpu.vector_store %arg5[%c0_10, %c0_11, %c0_12], %20 {strides = array<i32>} : memref<2x8x1xf32, #tpu.memory_space<vmem>>, vector<2x8x1xf32>,
    %22 = vector.broadcast %20 : vector<2x8x1xf32> to vector<2x8x32xf32>
    %23 = arith.mulf %22, %0 : vector<2x8x32xf32>
    %cst_13 = arith.constant dense<0.000000e+00> : vector<2x32xf32>
    %24 = vector.multi_reduction <add>, %23, %cst_13 [1] : vector<2x8x32xf32> to vector<2x32xf32>
    %c0_14 = arith.constant 0 : index
    %c0_15 = arith.constant 0 : index
    %25 = vector.load %arg4[%c0_14, %c0_15] : memref<2x32xf32, #tpu.memory_space<vmem>>, vector<2x32xf32>
    tpu.vector_store %arg4[%c0_14, %c0_15], %24 {strides = array<i32>} : memref<2x32xf32, #tpu.memory_space<vmem>>, vector<2x32xf32>,
    return
  }
  func.func @transform_0(%arg0: i32) -> (i32, i32, i32) {
    %c0_i32 = arith.constant 0 : i32
    %c0_i32_0 = arith.constant 0 : i32
    %c0_i32_1 = arith.constant 0 : i32
    return %arg0, %c0_i32, %c0_i32_0 : i32, i32, i32
  }
  func.func @transform_1(%arg0: i32) -> (i32, i32) {
    %c0_i32 = arith.constant 0 : i32
    %c0_i32_0 = arith.constant 0 : i32
    %c0_i32_1 = arith.constant 0 : i32
    return %c0_i32, %c0_i32_0 : i32, i32
  }
  func.func @transform_2(%arg0: i32) -> (i32, i32) {
    %c0_i32 = arith.constant 0 : i32
    %c0_i32_0 = arith.constant 0 : i32
    %c0_i32_1 = arith.constant 0 : i32
    return %c0_i32, %c0_i32_0 : i32, i32
  }
  func.func @transform_3(%arg0: i32) -> (i32, i32) {
    %c0_i32 = arith.constant 0 : i32
    %c0_i32_0 = arith.constant 0 : i32
    return %arg0, %c0_i32 : i32, i32
  }
  func.func @transform_4(%arg0: i32) -> (i32, i32, i32) {
    %c0_i32 = arith.constant 0 : i32
    %c0_i32_0 = arith.constant 0 : i32
    %c0_i32_1 = arith.constant 0 : i32
    return %arg0, %c0_i32, %c0_i32_0 : i32, i32, i32
  }
}

</mosaic_0001>

<llo_original>
// kernel: tpu_custom_call.1
$region0: #{tpu_custom_call.1}
  #allocation0 [shape = 'u32[]', space=smem, size = 0x4, offset = 0x4, fixed_abs, tag = 'smem constant byte address 0x4 - core index']
  #allocation1 [shape = 'u32[72,128]{1,0:T(1,128)}', space=vmem, size = 0x9000, scoped, tag = 'internal scratch']
  %s0 = inlined_call_operand.hbm [shape: f32[2,8,32], index: 0, kind: input, shape index: {}]
  %s1 = inlined_call_operand.hbm [shape: f32[32,256], index: 1, kind: input, shape index: {}]
  %s2 = inlined_call_operand.hbm [shape: f32[1,256], index: 2, kind: input, shape index: {}]
  %s3 = inlined_call_operand.hbm [shape: f32[2,32], index: 3, kind: output, shape index: {0}]
  %s4 = inlined_call_operand.vmem [shape: f32[2,8,1], index: 4, kind: output, shape index: {1}]
  %5 = xla_tuple %s3, %s4
  %s6 = sld [smem:[#allocation0]]
  $region42: #{tpu_custom_call.1} parent=0
    _
  %s8 = ssub.s32 1, %s6
  %s9 = scalar_select 0, %s8, %s6
  $region1: #{tpu_custom_call.1} parent=0
    #allocation2 [shape = 'u8[8192]{0}', space=vmem, size = 0x2000, scoped, tag = 'input window, operand 0, single buffered']
    #allocation3 [shape = 's32[1]{0}', space=sflag, size = 0x4, scoped, tag = 'scoped memory for tpu_custom_call.1']
    #allocation4 [shape = 's32[1]{0}', space=sflag, size = 0x4, scoped, tag = 'scoped memory for tpu_custom_call.1']
    #allocation5 [shape = 'u8[32768]{0}', space=vmem, size = 0x8000, scoped, tag = 'input window, operand 1, single buffered']
    #allocation6 [shape = 's32[1]{0}', space=sflag, size = 0x4, scoped, tag = 'scoped memory for tpu_custom_call.1']
    #allocation7 [shape = 'u8[1024]{0}', space=vmem, size = 0x400, scoped, tag = 'input window, operand 2, single buffered']
    #allocation8 [shape = 'u8[1024]{0}', space=vmem, size = 0x400, scoped, tag = 'output window, operand 0, single buffered']
    %10 = vsyncpa [#allocation3], 0
    %11 = vsyncpa [#allocation6], 0
    %12 = vsyncpa [#allocation4], 0
    // Predicated region
    $region2: #{tpu_custom_call.1} parent=1 // pred_check
      _
    $region3: #{tpu_custom_call.1} parent=1 // pred_check_branch
      %14 = sbr.rel (0) target = $region5
    $region4: #{tpu_custom_call.1} parent=1 // pred_region
      %16 = vsyncadd [#allocation3], 0
      %s17 = sshll.u32 %s0, 4
      %s18 = int_to_ptr.hbm [resolvable:$true] %s17
      %s19 = sshll.u32 [#allocation2], 4
      %s20 = int_to_ptr.vmem [resolvable:$true] %s19
      %25 = dma.hbm_to_vmem [thread:$0]  %s18, 256, %s20, [#allocation3], 128, 128, 8
    $region5: #{tpu_custom_call.1} parent=1 // pred_fallthru
      _
    // Predicated region
    $region6: #{tpu_custom_call.1} parent=1 // pred_check
      _
    $region7: #{tpu_custom_call.1} parent=1 // pred_check_branch
      %27 = sbr.rel (0) target = $region9
    $region8: #{tpu_custom_call.1} parent=1 // pred_region
      %29 = vsyncadd [#allocation6], 0
      %s30 = sshll.u32 %s1, 4
      %s31 = int_to_ptr.hbm [resolvable:$true] %s30
      %s32 = sshll.u32 [#allocation5], 4
      %s33 = int_to_ptr.vmem [resolvable:$true] %s32
      %38 = dma.hbm_to_vmem [thread:$0]  %s31, 1024, %s33, [#allocation6], 256, 256, 16
    $region9: #{tpu_custom_call.1} parent=1 // pred_fallthru
      _
    // Predicated region
    $region10: #{tpu_custom_call.1} parent=1 // pred_check
      _
    $region11: #{tpu_custom_call.1} parent=1 // pred_check_branch
      %40 = sbr.rel (0) target = $region13
    $region12: #{tpu_custom_call.1} parent=1 // pred_region
      %42 = vsyncadd [#allocation6], 0
      %s44 = sshll.u32 %s2, 4
      %s45 = int_to_ptr.hbm [resolvable:$true] %s44
      %s46 = sshll.u32 [#allocation7], 4
      %s47 = int_to_ptr.vmem [resolvable:$true] %s46
      %49 = dma.hbm_to_vmem [thread:$0]  %s45, 32, %s47, [#allocation6]
    $region13: #{tpu_custom_call.1} parent=1 // pred_fallthru
      _
    // Predicated region
    $region14: #{tpu_custom_call.1} parent=1 // pred_check
      _
    $region15: #{tpu_custom_call.1} parent=1 // pred_check_branch
      %51 = sbr.rel (0) target = $region17
    $region16: #{tpu_custom_call.1} parent=1 // pred_region
      %53 = dma.done [#allocation3], 256
    $region17: #{tpu_custom_call.1} parent=1 // pred_fallthru
      _
    // Predicated region
    $region18: #{tpu_custom_call.1} parent=1 // pred_check
      _
    $region19: #{tpu_custom_call.1} parent=1 // pred_check_branch
      %55 = sbr.rel (0) target = $region21
    $region20: #{tpu_custom_call.1} parent=1 // pred_region
      %57 = dma.done [#allocation6], 1024
    $region21: #{tpu_custom_call.1} parent=1 // pred_fallthru
      _
    // Predicated region
    $region22: #{tpu_custom_call.1} parent=1 // pred_check
      _
    $region23: #{tpu_custom_call.1} parent=1 // pred_check_branch
      %59 = sbr.rel (0) target = $region25
    $region24: #{tpu_custom_call.1} parent=1 // pred_region
      %61 = dma.done [#allocation6], 32
    $region25: #{tpu_custom_call.1} parent=1 // pred_fallthru
      _
    %v62 = vld [vmem:[#allocation2] sm:$0xff]
    %v63 = vld [vmem:[#allocation2 + $0x8] sm:$0xff]
    %v64 = vld [vmem:[#allocation5] sm:$0xff]
    %v65 = vld [vmem:[#allocation5 + $0x8] sm:$0xff]
    %v66 = vld [vmem:[#allocation5 + $0x10] sm:$0xff]
    %v67 = vld [vmem:[#allocation5 + $0x18] sm:$0xff]
    %v68 = vld [vmem:[#allocation5 + $0x20] sm:$0xff]
    %v69 = vld [vmem:[#allocation5 + $0x28] sm:$0xff]
    %v70 = vld [vmem:[#allocation5 + $0x30] sm:$0xff]
    %v71 = vld [vmem:[#allocation5 + $0x38] sm:$0xff]
    %vm72 = vcmask 261120
    %v74 = vsel %vm72, %v62, 0
    %v77 = vsel %vm72, %v63, 0
    %79 = vmatpush.msra.mxu0 0.0
    %80 = vmatpush.msra.mxu0 0.0
    %81 = vmatpush.msra.mxu0 0.0
    %82 = vmatpush.msra.mxu0 0.0
    %83 = vmatpush.msra.mxu0 0.0
    %84 = vmatpush.msra.mxu0 0.0
    %85 = vmatpush.msra.mxu0 0.0
    %86 = vmatpush.msra.mxu0 0.0
    %87 = vmatpush.msra.mxu0 0.0
    %88 = vmatpush.msra.mxu0 0.0
    %89 = vmatpush.msra.mxu0 0.0
    %90 = vmatpush.msra.mxu0 0.0
    %91 = vmatpush.msra.mxu0 %v70
    %92 = vmatpush.msra.mxu0 %v68
    %93 = vmatpush.msra.mxu0 %v66
    %94 = vmatpush.msra.mxu0 %v64
    %95 = vmatmul.f32.gmra.mxu0 %v74
    %v96 = vpop.f32.mrf.mxu0
    %v97 = vadd.f32 0.0, %v96
    %98 = vmatmul.f32.gmra.mxu0 %v77
    %v99 = vpop.f32.mrf.mxu0
    %v100 = vadd.f32 0.0, %v99
    %101 = vdwg.mxu0
    %102 = vmatpush.msra.mxu0 0.0
    %103 = vmatpush.msra.mxu0 0.0
    %104 = vmatpush.msra.mxu0 0.0
    %105 = vmatpush.msra.mxu0 0.0
    %106 = vmatpush.msra.mxu0 0.0
    %107 = vmatpush.msra.mxu0 0.0
    %108 = vmatpush.msra.mxu0 0.0
    %109 = vmatpush.msra.mxu0 0.0
    %110 = vmatpush.msra.mxu0 0.0
    %111 = vmatpush.msra.mxu0 0.0
    %112 = vmatpush.msra.mxu0 0.0
    %113 = vmatpush.msra.mxu0 0.0
    %114 = vmatpush.msra.mxu0 %v71
    %115 = vmatpush.msra.mxu0 %v69
    %116 = vmatpush.msra.mxu0 %v67
    %117 = vmatpush.msra.mxu0 %v65
    %118 = vmatmul.f32.gmra.mxu0 %v74
    %v119 = vpop.f32.mrf.mxu0
    %v120 = vadd.f32 0.0, %v119
    %121 = vmatmul.f32.gmra.mxu0 %v77
    %v122 = vpop.f32.mrf.mxu0
    %v123 = vadd.f32 0.0, %v122
    %124 = vdwg.mxu0
    %v125 = vmax.f32 %v97, 0.0
    %v126 = vmax.f32 %v120, 0.0
    %v127 = vmax.f32 %v100, 0.0
    %v128 = vmax.f32 %v123, 0.0
    %v129 = vld [vmem:[#allocation7] sm:$0x3]
    %v131 = vperm.slane %v129, 0
    %v132 = vperm.slane %v129, 1
    %v135 = vmul.f32 %v125, %v131
    %v136 = vmul.f32 %v126, %v132
    %v137 = vmul.f32 %v127, %v131
    %v138 = vmul.f32 %v128, %v132
    %v139 = vadd.f32 %v135, %v136
    %140 = vadd.xlane.f32.xlu0 %v139
    %v141 = vpop.xlane.xlu0 %140
    %v142 = vadd.f32 %v137, %v138
    %143 = vadd.xlane.f32.xlu0 %v142
    %v144 = vpop.xlane.xlu0 %143
    %v145 = vrot.slane %v141, 4
    %v146 = vmax.f32 %v141, %v145
    %v147 = vrot.slane %v146, 2
    %v148 = vmax.f32 %v146, %v147
    %v149 = vrot.slane %v148, 1
    %v150 = vmax.f32 %v148, %v149
    %v151 = vrot.slane %v144, 4
    %v152 = vmax.f32 %v144, %v151
    %v153 = vrot.slane %v152, 2
    %v154 = vmax.f32 %v152, %v153
    %v155 = vrot.slane %v154, 1
    %v156 = vmax.f32 %v154, %v155
    %v157 = vsub.f32 %v141, %v150
    %v158 = vsub.f32 %v144, %v156
    %v159 = vmul.f32 %v157, 1.442695
    %v160 = vpow.pop %v159
    %v161 = vmul.f32 %v158, 1.442695
    %v162 = vpow.pop %v161
    %v163 = vrot.slane %v160, 4
    %v164 = vadd.f32 %v160, %v163
    %v165 = vrot.slane %v164, 2
    %v166 = vadd.f32 %v164, %v165
    %v167 = vrot.slane %v166, 1
    %v168 = vadd.f32 %v166, %v167
    %v169 = vrot.slane %v162, 4
    %v170 = vadd.f32 %v162, %v169
    %v171 = vrot.slane %v170, 2
    %v172 = vadd.f32 %v170, %v171
    %v173 = vrot.slane %v172, 1
    %v174 = vadd.f32 %v172, %v173
    %v175 = vrcp.pop %v168
    %v176 = vmul.f32 %v168, %v175
    %v177 = vsub.f32 1.0, %v176
    %v178 = vmul.f32 %v175, %v177
    %v179 = vadd.f32 %v175, %v178
    %vm180 = vweird.f32 %v168
    %vm181 = vweird.f32 %v175
    %vm182 = vmor %vm180, %vm181
    %v183 = vsel %vm182, %v175, %v179
    %v184 = vand.u32 2147483647, %v168
    %vm185 = vcmp.eq.f32.partialorder %v184, 8.507059e+37
    %v186 = vand.u32 %v168, 2147483648
    %v187 = vor.u32 1.1754944e-38, %v186
    %v188 = vsel %vm185, %v187, %v183
    %v189 = vmul.f32 %v160, %v188
    %v190 = vrcp.pop %v174
    %v191 = vmul.f32 %v174, %v190
    %v192 = vsub.f32 1.0, %v191
    %v193 = vmul.f32 %v190, %v192
    %v194 = vadd.f32 %v190, %v193
    %vm195 = vweird.f32 %v174
    %vm196 = vweird.f32 %v190
    %vm197 = vmor %vm195, %vm196
    %v198 = vsel %vm197, %v190, %v194
    %v199 = vand.u32 2147483647, %v174
    %vm200 = vcmp.eq.f32.partialorder %v199, 8.507059e+37
    %v201 = vand.u32 %v174, 2147483648
    %v202 = vor.u32 1.1754944e-38, %v201
    %v203 = vsel %vm200, %v202, %v198
    %v204 = vmul.f32 %v162, %v203
    %vm205 = vcmask 7168
    %206 = vst.msk [vmem:[%s4] sm:$0xff] %vm205, %v189
    %207 = vst.msk [vmem:[%s4 + $0x8] sm:$0xff] %vm205, %v204
    %v208 = vmul.f32 %v189, %v62
    %v209 = vmul.f32 %v204, %v63
    %v210 = vsel %vm72, %v208, 0.0
    %v211 = vrot.slane %v210, 4
    %v212 = vadd.f32 %v210, %v211
    %v213 = vrot.slane %v212, 2
    %v214 = vadd.f32 %v212, %v213
    %v215 = vrot.slane %v214, 1
    %v216 = vadd.f32 %v214, %v215
    %v217 = vsel %vm72, %v209, 0.0
    %v218 = vrot.slane %v217, 4
    %v219 = vadd.f32 %v217, %v218
    %v220 = vrot.slane %v219, 2
    %v221 = vadd.f32 %v219, %v220
    %v222 = vrot.slane %v221, 1
    %v223 = vadd.f32 %v221, %v222
    %vm226 = vcmask 1041409
    %v227 = vsel %vm226, %v223, %v216
    %vm229 = vcmask 254976
    %230 = vst.msk [vmem:[#allocation8] sm:$0x3] %vm229, %v227
    // Predicated region
    $region26: #{tpu_custom_call.1} parent=1 // pred_check
      _
    $region27: #{tpu_custom_call.1} parent=1 // pred_check_branch
      %232 = sbr.rel (0) target = $region29
    $region28: #{tpu_custom_call.1} parent=1 // pred_region
      %234 = vsyncadd [#allocation4], 0
      %s236 = sshll.u32 [#allocation8], 4
      %s237 = int_to_ptr.vmem [resolvable:$true] %s236
      %s238 = sshll.u32 %s3, 4
      %s239 = int_to_ptr.hbm [resolvable:$true] %s238
      %241 = dma.vmem_to_hbm [thread:$0]  %s237, 32, %s239, [#allocation4]
    $region29: #{tpu_custom_call.1} parent=1 // pred_fallthru
      _
    // Predicated region
    $region30: #{tpu_custom_call.1} parent=1 // pred_check
      _
    $region31: #{tpu_custom_call.1} parent=1 // pred_check_branch
      %243 = sbr.rel (0) target = $region33
    $region32: #{tpu_custom_call.1} parent=1 // pred_region
      _
    $region33: #{tpu_custom_call.1} parent=1 // pred_fallthru
      _
    // Predicated region
    $region34: #{tpu_custom_call.1} parent=1 // pred_check
      _
    $region35: #{tpu_custom_call.1} parent=1 // pred_check_branch
      %245 = sbr.rel (0) target = $region37
    $region36: #{tpu_custom_call.1} parent=1 // pred_region
      %247 = dma.done [#allocation4], 32
    $region37: #{tpu_custom_call.1} parent=1 // pred_fallthru
      _
    // Predicated region
    $region38: #{tpu_custom_call.1} parent=1 // pred_check
      _
    $region39: #{tpu_custom_call.1} parent=1 // pred_check_branch
      %249 = sbr.rel (0) target = $region41
    $region40: #{tpu_custom_call.1} parent=1 // pred_region
      _
    $region41: #{tpu_custom_call.1} parent=1 // pred_fallthru
      _
    %250 = vsyncpa [#allocation3], 1
    %251 = vsyncpa [#allocation6], 1
    %252 = vsyncpa [#allocation4], 1

</llo_original>
